<compile_context>
chip_gen: v6e
topology: v6e:2x2x1
jax: 0.10.0
libtpu: 0.0.40
codegen_flags: <defaults>
</compile_context>

<pallas_src>
import functools
import math

import jax
import jax.numpy as jnp
from jax import lax
from jax.experimental import pallas as pl
from jax.experimental.pallas import tpu as pltpu


def _const_block_spec(block_shape, index_map):
    """BlockSpec for grid-invariant operands; single-buffered when supported."""
    try:
        return pl.BlockSpec(block_shape, index_map, pipeline_mode=pl.Buffered(1))
    except Exception:  # pipeline_mode / Buffered unavailable -> default buffering
        return pl.BlockSpec(block_shape, index_map)


def _chip_tuning():
    try:
        kind = jax.devices()[0].device_kind.lower()
    except Exception:
        kind = ""
    if "v7" in kind:
        # v7x: 64 MiB physical VMEM per TensorCore -> leave compiler headroom.
        return dict(vmem_limit=48 * 1024 * 1024, big_query_tile=False)
    if "v6" in kind:
        # v6e: 128 MiB VMEM + 256-wide MXU -> bigger query tiles pay off.
        return dict(vmem_limit=100 * 1024 * 1024, big_query_tile=True)
    # v5e / unknown: 128x128 MXU, keep 128-row tiles and a safe VMEM limit.
    return dict(vmem_limit=64 * 1024 * 1024, big_query_tile=False)


# -------------------- kernel 1: K/V projection (head-major) ------------------
def _kv_projection_kernel(hid_ref, wk_ref, bk_ref, wv_ref, bv_ref,
                          k_out_ref, v_out_ref, *, num_heads, head_dim):
    x = hid_ref[0].astype(jnp.bfloat16)                                    # (S, H)
    k = jnp.dot(x, wk_ref[...], preferred_element_type=jnp.float32) + bk_ref[...]
    v = jnp.dot(x, wv_ref[...], preferred_element_type=jnp.float32) + bv_ref[...]
    # One-time head-major relayout; amortized over every downstream query tile.
    for h in range(num_heads):
        lo = h * head_dim
        k_out_ref[0, h] = k[:, lo:lo + head_dim].astype(k_out_ref.dtype)
        v_out_ref[0, h] = v[:, lo:lo + head_dim].astype(v_out_ref.dtype)


# ---------- kernel 2: attention + output dense + residual + LayerNorm --------
def _make_attention_kernel(num_heads, head_dim, ln_eps, output_attentions):
    scale = 1.0 / math.sqrt(head_dim)

    def kernel(hid_q_ref, k_ref, v_ref, mask_ref,
               wq_ref, bq_ref, wo_ref, bo_ref, gamma_ref, beta_ref,
               out_ref, *rest):
        if output_attentions:
            probs_ref, q_sc, acc_sc = rest
        else:
            probs_ref = None
            q_sc, acc_sc = rest

        # Q projection for this query tile (full H-wide MXU matmul).  The
        # softmax 1/sqrt(head_dim) scale is folded into q once, not per head.
        x_q_f32 = hid_q_ref[0].astype(jnp.float32)                         # (TQ, H)
        q = jnp.dot(x_q_f32.astype(jnp.bfloat16), wq_ref[...],
                    preferred_element_type=jnp.float32) + bq_ref[...]
        q = q * scale
        # Stage Q head-major so the rolled head loop only needs leading-dim
        # indexing (no per-head lane-offset slices inside the loop).
        for h in range(num_heads):
            lo = h * head_dim
            q_sc[h] = q[:, lo:lo + head_dim].astype(jnp.bfloat16)

        # attattr masking hoisted out of the head loop:
        #   scores = scores * (mask >= 0) + mask
        mask_row = mask_ref[0].astype(jnp.float32)                         # (1, S)
        keep = (mask_row >= 0.0).astype(jnp.float32)

        acc_sc[...] = jnp.zeros_like(acc_sc)

        def head_body(h, carry):
            q_h = q_sc[h]                                                  # (TQ, dh) bf16
            k_h = k_ref[0, h]                                              # (S, dh)  bf16
            v_h = v_ref[0, h]                                              # (S, dh)  bf16

            # q @ k^T: contract the minor dim of both operands (no transpose).
            scores = lax.dot_general(
                q_h, k_h, (((1,), (1,)), ((), ())),
                preferred_element_type=jnp.float32)                        # (TQ, S)
            scores = scores * keep + mask_row

            # Softmax over keys; exact division (probs are a kernel output).
            m = jnp.max(scores, axis=-1, keepdims=True)
            e = jnp.exp(scores - m)
            probs = e / jnp.sum(e, axis=-1, keepdims=True)                 # (TQ, S)
            if probs_ref is not None:
                probs_ref[0, h] = probs.astype(probs_ref.dtype)

            # context_h = probs @ V_h; output projection folded in as an
            # accumulation over heads with head-major Wo (nH, dh, H).
            ctx_h = jnp.dot(probs.astype(jnp.bfloat16), v_h,
                            preferred_element_type=jnp.float32)            # (TQ, dh)
            acc_sc[...] += jnp.dot(ctx_h.astype(jnp.bfloat16), wo_ref[h],
                                   preferred_element_type=jnp.float32)     # (TQ, H)
            return carry

        lax.fori_loop(0, num_heads, head_body, 0)

        # BertSelfOutput: dense bias -> (dropout = identity) -> residual -> LN.
        y = acc_sc[...] + bo_ref[...] + x_q_f32
        mean = jnp.mean(y, axis=-1, keepdims=True)
        var = jnp.mean(jnp.square(y - mean), axis=-1, keepdims=True)
        normed = (y - mean) * lax.rsqrt(var + ln_eps)
        out_ref[0] = (normed * gamma_ref[...] + beta_ref[...]).astype(out_ref.dtype)

    return kernel


# ------------------------------ host wrapper ---------------------------------
def bert_attention(hidden_states, attention_mask, params, *, num_heads,
                   ln_eps=1e-12, output_attentions=True):
    """hidden_states: (B, S, H) f32; attention_mask: (B, 1, S) additive mask."""
    B, S, H = hidden_states.shape
    head_dim = H // num_heads
    bf16 = jnp.bfloat16

    tune = _chip_tuning()
    vmem_limit = tune["vmem_limit"]

    # Query-tile size + padding of ragged sequence lengths.
    if S <= 128:
        tq, s_pad = S, S
    else:
        tq = 256 if (tune["big_query_tile"] and S % 256 == 0) else 128
        s_pad = pl.cdiv(S, tq) * tq
    num_q = s_pad // tq

    if s_pad != S:
        pad = s_pad - S
        hidden_p = jnp.pad(hidden_states, ((0, 0), (0, pad), (0, 0)))
        # Padded keys get a very negative additive mask -> ~zero probability.
        mask_p = jnp.pad(attention_mask, ((0, 0), (0, 0), (0, pad)),
                         constant_values=-1e9)
    else:
        hidden_p, mask_p = hidden_states, attention_mask

    wq = params["wq"].astype(bf16)
    wk = params["wk"].astype(bf16)
    wv = params["wv"].astype(bf16)
    wo_hm = params["wo"].astype(bf16).reshape(num_heads, head_dim, H)  # head-major

    # ---- kernel 1: K/V projection -------------------------------------------
    kv_cost = pl.CostEstimate(
        flops=4 * B * s_pad * H * H,
        transcendentals=0,
        bytes_accessed=(B * s_pad * H * 4 + 2 * H * H * 2 + 2 * H * 4
                        + 2 * B * num_heads * s_pad * head_dim * 2))
    kv_fn = pl.pallas_call(
        functools.partial(_kv_projection_kernel,
                          num_heads=num_heads, head_dim=head_dim),
        out_shape=[jax.ShapeDtypeStruct((B, num_heads, s_pad, head_dim), bf16)] * 2,
        grid_spec=pltpu.PrefetchScalarGridSpec(
            num_scalar_prefetch=0,
            grid=(B,),
            in_specs=[
                pl.BlockSpec((1, s_pad, H), lambda b: (b, 0, 0)),
                _const_block_spec((H, H), lambda b: (0, 0)),
                _const_block_spec((1, H), lambda b: (0, 0)),
                _const_block_spec((H, H), lambda b: (0, 0)),
                _const_block_spec((1, H), lambda b: (0, 0)),
            ],
            out_specs=[
                pl.BlockSpec((1, num_heads, s_pad, head_dim), lambda b: (b, 0, 0, 0)),
                pl.BlockSpec((1, num_heads, s_pad, head_dim), lambda b: (b, 0, 0, 0)),
            ],
        ),
        compiler_params=pltpu.CompilerParams(
            dimension_semantics=("parallel",),
            vmem_limit_bytes=vmem_limit),
        cost_estimate=kv_cost,
    )
    k_hm, v_hm = kv_fn(hidden_p, wk, params["bk"], wv, params["bv"])

    # ---- kernel 2: attention + output dense + residual + LayerNorm ----------
    probs_bytes = B * num_heads * s_pad * s_pad * 2 if output_attentions else 0
    attn_cost = pl.CostEstimate(
        flops=(4 * B * s_pad * H * H
               + 4 * B * num_heads * s_pad * s_pad * head_dim),
        transcendentals=B * num_heads * s_pad * s_pad,
        bytes_accessed=(B * s_pad * H * 4
                        + 2 * B * num_heads * s_pad * head_dim * 2
                        + B * s_pad * 4
                        + (H * H + num_heads * head_dim * H) * 2 + 4 * H * 4
                        + B * s_pad * H * 4
                        + probs_bytes))

    in_specs = [
        pl.BlockSpec((1, tq, H), lambda b, q: (b, q, 0)),                   # hidden tile
        pl.BlockSpec((1, num_heads, s_pad, head_dim), lambda b, q: (b, 0, 0, 0)),  # K
        pl.BlockSpec((1, num_heads, s_pad, head_dim), lambda b, q: (b, 0, 0, 0)),  # V
        pl.BlockSpec((1, 1, s_pad), lambda b, q: (b, 0, 0)),                # mask
        _const_block_spec((H, H), lambda b, q: (0, 0)),                     # Wq
        _const_block_spec((1, H), lambda b, q: (0, 0)),                     # bq
        _const_block_spec((num_heads, head_dim, H), lambda b, q: (0, 0, 0)),  # Wo
        _const_block_spec((1, H), lambda b, q: (0, 0)),                     # bo
        _const_block_spec((1, H), lambda b, q: (0, 0)),                     # gamma
        _const_block_spec((1, H), lambda b, q: (0, 0)),                     # beta
    ]
    out_specs = [pl.BlockSpec((1, tq, H), lambda b, q: (b, q, 0))]
    out_shape = [jax.ShapeDtypeStruct((B, s_pad, H), jnp.float32)]
    if output_attentions:
        out_specs.append(
            pl.BlockSpec((1, num_heads, tq, s_pad), lambda b, q: (b, 0, q, 0)))
        # bf16 probs halve the dominant HBM writeback + the VMEM output block.
        out_shape.append(jax.ShapeDtypeStruct((B, num_heads, s_pad, s_pad), bf16))

    attn_fn = pl.pallas_call(
        _make_attention_kernel(num_heads, head_dim, ln_eps, output_attentions),
        out_shape=out_shape,
        grid_spec=pltpu.PrefetchScalarGridSpec(
            num_scalar_prefetch=0,
            grid=(B, num_q),
            in_specs=in_specs,
            out_specs=out_specs,
            scratch_shapes=[
                pltpu.VMEM((num_heads, tq, head_dim), bf16),   # head-major Q
                pltpu.VMEM((tq, H), jnp.float32),              # out-proj accumulator
            ],
        ),
        compiler_params=pltpu.CompilerParams(
            # K/V are precomputed so every (batch, query-tile) point is
            # independent -> both axes shardable by megacore.
            dimension_semantics=("parallel", "parallel"),
            vmem_limit_bytes=vmem_limit),
        cost_estimate=attn_cost,
    )
    results = attn_fn(hidden_p, k_hm, v_hm, mask_p,
                      wq, params["bq"], wo_hm, params["bo"],
                      params["gamma"], params["beta"])

    if output_attentions:
        out_p, probs_p = results
    else:
        out_p = results[0]

    attention_output = out_p if s_pad == S else out_p[:, :S, :]
    if not output_attentions:
        return (attention_output,)
    attention_probs = probs_p if s_pad == S else probs_p[:, :, :S, :S]
    return attention_output, attention_probs


# ---------------------------- pure-JAX reference -----------------------------
def _reference(hidden_states, attention_mask, params, num_heads, ln_eps=1e-12):
    B, S, H = hidden_states.shape
    dh = H // num_heads
    q = hidden_states @ params["wq"] + params["bq"]
    k = hidden_states @ params["wk"] + params["bk"]
    v = hidden_states @ params["wv"] + params["bv"]
    split = lambda x: x.reshape(B, S, num_heads, dh).transpose(0, 2, 1, 3)
    q, k, v = split(q), split(k), split(v)
    scores = jnp.einsum("bhqd,bhkd->bhqk", q, k) / math.sqrt(dh)
    mask = attention_mask[:, None, :, :]
    scores = scores * (mask >= 0).astype(scores.dtype) + mask
    probs = jax.nn.softmax(scores, axis=-1)
    ctx = jnp.einsum("bhqk,bhkd->bhqd", probs, v)
    ctx = ctx.transpose(0, 2, 1, 3).reshape(B, S, H)
    y = ctx @ params["wo"] + params["bo"] + hidden_states
    mean = y.mean(-1, keepdims=True)
    var = ((y - mean) ** 2).mean(-1, keepdims=True)
    return (y - mean) / jnp.sqrt(var + ln_eps) * params["gamma"] + params["beta"], probs


# --------------------------------- main ---------------------------------------
if __name__ == "__main__":
    B, S, H = 2, 8, 32
    NUM_HEADS = 4

    key = jax.random.PRNGKey(0)
    ks = jax.random.split(key, 6)

    hidden_states = jax.random.normal(ks[0], (B, S, H), dtype=jnp.float32)

    # BERT-style additive attention mask: mask last two keys of batch elem 1.
    attn_ids = jnp.ones((B, S), dtype=jnp.float32)
    attn_ids = attn_ids.at[1, -2:].set(0.0)
    attention_mask = ((1.0 - attn_ids) * -10000.0)[:, None, :]   # (B, 1, S)

    w_scale = 0.02
    params = {
        "wq": w_scale * jax.random.normal(ks[1], (H, H), dtype=jnp.float32),
        "bq": jnp.zeros((1, H), dtype=jnp.float32),
        "wk": w_scale * jax.random.normal(ks[2], (H, H), dtype=jnp.float32),
        "bk": jnp.zeros((1, H), dtype=jnp.float32),
        "wv": w_scale * jax.random.normal(ks[3], (H, H), dtype=jnp.float32),
        "bv": jnp.zeros((1, H), dtype=jnp.float32),
        "wo": w_scale * jax.random.normal(ks[4], (H, H), dtype=jnp.float32),
        "bo": jnp.zeros((1, H), dtype=jnp.float32),
        "gamma": jnp.ones((1, H), dtype=jnp.float32),
        "beta": jnp.zeros((1, H), dtype=jnp.float32),
    }

    attention_output, attention_probs = bert_attention(
        hidden_states, attention_mask, params, num_heads=NUM_HEADS)
    jax.block_until_ready(attention_output)
    jax.block_until_ready(attention_probs)

    assert attention_output.shape == (B, S, H)
    assert attention_probs.shape == (B, NUM_HEADS, S, S)
    assert attention_output.dtype == jnp.float32

    ref_out, ref_probs = _reference(hidden_states, attention_mask, params, NUM_HEADS)
    assert jnp.allclose(attention_output, ref_out, atol=3e-2, rtol=3e-2)
    assert jnp.allclose(attention_probs.astype(jnp.float32), ref_probs, atol=2e-2)
    row_sums = attention_probs.astype(jnp.float32).sum(-1)
    assert jnp.allclose(row_sums, jnp.ones_like(row_sums), atol=5e-2)

    print("KERNEL_OK")
</pallas_src>

<mosaic_0001>
module attributes {stable_mosaic.version = 11 : i64} {
  func.func @_kv_projection_kernel(%arg0: i32, %arg1: memref<1x8x32xf32, #tpu.memory_space<vmem>>, %arg2: memref<32x32xbf16, #tpu.memory_space<vmem>>, %arg3: memref<1x32xf32, #tpu.memory_space<vmem>>, %arg4: memref<32x32xbf16, #tpu.memory_space<vmem>>, %arg5: memref<1x32xf32, #tpu.memory_space<vmem>>, %arg6: memref<1x4x8x8xbf16, #tpu.memory_space<vmem>>, %arg7: memref<1x4x8x8xbf16, #tpu.memory_space<vmem>>) attributes {dimension_semantics = [#tpu.dimension_semantics<parallel>], iteration_bounds = array<i64: 2>, scalar_prefetch = 0 : i64, scratch_operands = 0 : i64, tpu.core_type = #tpu.core_type<tc>, window_params = [{transform_indices = @transform_0, window_bounds = array<i64: 1, 8, 32>}, {pipeline_mode = #tpu.pipeline_mode<synchronous>, transform_indices = @transform_1, window_bounds = array<i64: 32, 32>}, {pipeline_mode = #tpu.pipeline_mode<synchronous>, transform_indices = @transform_2, window_bounds = array<i64: 1, 32>}, {pipeline_mode = #tpu.pipeline_mode<synchronous>, transform_indices = @transform_3, window_bounds = array<i64: 32, 32>}, {pipeline_mode = #tpu.pipeline_mode<synchronous>, transform_indices = @transform_4, window_bounds = array<i64: 1, 32>}, {transform_indices = @transform_5, window_bounds = array<i64: 1, 4, 8, 8>}, {transform_indices = @transform_6, window_bounds = array<i64: 1, 4, 8, 8>}]} {
    %c0 = arith.constant 0 : index
    %c0_0 = arith.constant 0 : index
    %c0_1 = arith.constant 0 : index
    %0 = vector.load %arg1[%c0, %c0_0, %c0_1] : memref<1x8x32xf32, #tpu.memory_space<vmem>>, vector<1x8x32xf32>
    %1 = vector.shape_cast %0 : vector<1x8x32xf32> to vector<8x32xf32>
    %2 = arith.truncf %1 : vector<8x32xf32> to vector<8x32xbf16>
    %c0_2 = arith.constant 0 : index
    %c0_3 = arith.constant 0 : index
    %3 = vector.load %arg2[%c0_2, %c0_3] : memref<32x32xbf16, #tpu.memory_space<vmem>>, vector<32x32xbf16>
    %cst = arith.constant dense<0.000000e+00> : vector<8x32xf32>
    %4 = tpu.matmul %2, %3, %cst {dimension_numbers = #tpu.dot_dimension_numbers<[1], [0], [0], [1], [0, 0, 1, 1], [], []>} : vector<8x32xbf16>, vector<32x32xbf16>, vector<8x32xf32> -> vector<8x32xf32>
    %c0_4 = arith.constant 0 : index
    %c0_5 = arith.constant 0 : index
    %5 = vector.load %arg3[%c0_4, %c0_5] : memref<1x32xf32, #tpu.memory_space<vmem>>, vector<1x32xf32>
    %6 = vector.broadcast %5 : vector<1x32xf32> to vector<8x32xf32>
    %7 = arith.addf %4, %6 : vector<8x32xf32>
    %c0_6 = arith.constant 0 : index
    %c0_7 = arith.constant 0 : index
    %8 = vector.load %arg4[%c0_6, %c0_7] : memref<32x32xbf16, #tpu.memory_space<vmem>>, vector<32x32xbf16>
    %cst_8 = arith.constant dense<0.000000e+00> : vector<8x32xf32>
    %9 = tpu.matmul %2, %8, %cst_8 {dimension_numbers = #tpu.dot_dimension_numbers<[1], [0], [0], [1], [0, 0, 1, 1], [], []>} : vector<8x32xbf16>, vector<32x32xbf16>, vector<8x32xf32> -> vector<8x32xf32>
    %c0_9 = arith.constant 0 : index
    %c0_10 = arith.constant 0 : index
    %10 = vector.load %arg5[%c0_9, %c0_10] : memref<1x32xf32, #tpu.memory_space<vmem>>, vector<1x32xf32>
    %11 = vector.broadcast %10 : vector<1x32xf32> to vector<8x32xf32>
    %12 = arith.addf %9, %11 : vector<8x32xf32>
    %13 = vector.extract_strided_slice %7 {offsets = [0, 0], sizes = [8, 8], strides = [1, 1]} : vector<8x32xf32> to vector<8x8xf32>
    %14 = arith.truncf %13 : vector<8x8xf32> to vector<8x8xbf16>
    %c0_11 = arith.constant 0 : index
    %c0_12 = arith.constant 0 : index
    %c0_13 = arith.constant 0 : index
    %c0_14 = arith.constant 0 : index
    %15 = vector.load %arg6[%c0_11, %c0_12, %c0_13, %c0_14] : memref<1x4x8x8xbf16, #tpu.memory_space<vmem>>, vector<1x1x8x8xbf16>
    %16 = vector.shape_cast %15 : vector<1x1x8x8xbf16> to vector<8x8xbf16>
    %17 = vector.shape_cast %14 : vector<8x8xbf16> to vector<1x1x8x8xbf16>
    tpu.vector_store %arg6[%c0_11, %c0_12, %c0_13, %c0_14], %17 {strides = array<i32>} : memref<1x4x8x8xbf16, #tpu.memory_space<vmem>>, vector<1x1x8x8xbf16>,
    %18 = vector.extract_strided_slice %12 {offsets = [0, 0], sizes = [8, 8], strides = [1, 1]} : vector<8x32xf32> to vector<8x8xf32>
    %19 = arith.truncf %18 : vector<8x8xf32> to vector<8x8xbf16>
    %c0_15 = arith.constant 0 : index
    %c0_16 = arith.constant 0 : index
    %c0_17 = arith.constant 0 : index
    %c0_18 = arith.constant 0 : index
    %20 = vector.load %arg7[%c0_15, %c0_16, %c0_17, %c0_18] : memref<1x4x8x8xbf16, #tpu.memory_space<vmem>>, vector<1x1x8x8xbf16>
    %21 = vector.shape_cast %20 : vector<1x1x8x8xbf16> to vector<8x8xbf16>
    %22 = vector.shape_cast %19 : vector<8x8xbf16> to vector<1x1x8x8xbf16>
    tpu.vector_store %arg7[%c0_15, %c0_16, %c0_17, %c0_18], %22 {strides = array<i32>} : memref<1x4x8x8xbf16, #tpu.memory_space<vmem>>, vector<1x1x8x8xbf16>,
    %23 = vector.extract_strided_slice %7 {offsets = [0, 8], sizes = [8, 8], strides = [1, 1]} : vector<8x32xf32> to vector<8x8xf32>
    %24 = arith.truncf %23 : vector<8x8xf32> to vector<8x8xbf16>
    %c0_19 = arith.constant 0 : index
    %c1 = arith.constant 1 : index
    %c0_20 = arith.constant 0 : index
    %c0_21 = arith.constant 0 : index
    %25 = vector.load %arg6[%c0_19, %c1, %c0_20, %c0_21] : memref<1x4x8x8xbf16, #tpu.memory_space<vmem>>, vector<1x1x8x8xbf16>
    %26 = vector.shape_cast %25 : vector<1x1x8x8xbf16> to vector<8x8xbf16>
    %27 = vector.shape_cast %24 : vector<8x8xbf16> to vector<1x1x8x8xbf16>
    tpu.vector_store %arg6[%c0_19, %c1, %c0_20, %c0_21], %27 {strides = array<i32>} : memref<1x4x8x8xbf16, #tpu.memory_space<vmem>>, vector<1x1x8x8xbf16>,
    %28 = vector.extract_strided_slice %12 {offsets = [0, 8], sizes = [8, 8], strides = [1, 1]} : vector<8x32xf32> to vector<8x8xf32>
    %29 = arith.truncf %28 : vector<8x8xf32> to vector<8x8xbf16>
    %c0_22 = arith.constant 0 : index
    %c1_23 = arith.constant 1 : index
    %c0_24 = arith.constant 0 : index
    %c0_25 = arith.constant 0 : index
    %30 = vector.load %arg7[%c0_22, %c1_23, %c0_24, %c0_25] : memref<1x4x8x8xbf16, #tpu.memory_space<vmem>>, vector<1x1x8x8xbf16>
    %31 = vector.shape_cast %30 : vector<1x1x8x8xbf16> to vector<8x8xbf16>
    %32 = vector.shape_cast %29 : vector<8x8xbf16> to vector<1x1x8x8xbf16>
    tpu.vector_store %arg7[%c0_22, %c1_23, %c0_24, %c0_25], %32 {strides = array<i32>} : memref<1x4x8x8xbf16, #tpu.memory_space<vmem>>, vector<1x1x8x8xbf16>,
    %33 = vector.extract_strided_slice %7 {offsets = [0, 16], sizes = [8, 8], strides = [1, 1]} : vector<8x32xf32> to vector<8x8xf32>
    %34 = arith.truncf %33 : vector<8x8xf32> to vector<8x8xbf16>
    %c0_26 = arith.constant 0 : index
    %c2 = arith.constant 2 : index
    %c0_27 = arith.constant 0 : index
    %c0_28 = arith.constant 0 : index
    %35 = vector.load %arg6[%c0_26, %c2, %c0_27, %c0_28] : memref<1x4x8x8xbf16, #tpu.memory_space<vmem>>, vector<1x1x8x8xbf16>
    %36 = vector.shape_cast %35 : vector<1x1x8x8xbf16> to vector<8x8xbf16>
    %37 = vector.shape_cast %34 : vector<8x8xbf16> to vector<1x1x8x8xbf16>
    tpu.vector_store %arg6[%c0_26, %c2, %c0_27, %c0_28], %37 {strides = array<i32>} : memref<1x4x8x8xbf16, #tpu.memory_space<vmem>>, vector<1x1x8x8xbf16>,
    %38 = vector.extract_strided_slice %12 {offsets = [0, 16], sizes = [8, 8], strides = [1, 1]} : vector<8x32xf32> to vector<8x8xf32>
    %39 = arith.truncf %38 : vector<8x8xf32> to vector<8x8xbf16>
    %c0_29 = arith.constant 0 : index
    %c2_30 = arith.constant 2 : index
    %c0_31 = arith.constant 0 : index
    %c0_32 = arith.constant 0 : index
    %40 = vector.load %arg7[%c0_29, %c2_30, %c0_31, %c0_32] : memref<1x4x8x8xbf16, #tpu.memory_space<vmem>>, vector<1x1x8x8xbf16>
    %41 = vector.shape_cast %40 : vector<1x1x8x8xbf16> to vector<8x8xbf16>
    %42 = vector.shape_cast %39 : vector<8x8xbf16> to vector<1x1x8x8xbf16>
    tpu.vector_store %arg7[%c0_29, %c2_30, %c0_31, %c0_32], %42 {strides = array<i32>} : memref<1x4x8x8xbf16, #tpu.memory_space<vmem>>, vector<1x1x8x8xbf16>,
    %43 = vector.extract_strided_slice %7 {offsets = [0, 24], sizes = [8, 8], strides = [1, 1]} : vector<8x32xf32> to vector<8x8xf32>
    %44 = arith.truncf %43 : vector<8x8xf32> to vector<8x8xbf16>
    %c0_33 = arith.constant 0 : index
    %c3 = arith.constant 3 : index
    %c0_34 = arith.constant 0 : index
    %c0_35 = arith.constant 0 : index
    %45 = vector.load %arg6[%c0_33, %c3, %c0_34, %c0_35] : memref<1x4x8x8xbf16, #tpu.memory_space<vmem>>, vector<1x1x8x8xbf16>
    %46 = vector.shape_cast %45 : vector<1x1x8x8xbf16> to vector<8x8xbf16>
    %47 = vector.shape_cast %44 : vector<8x8xbf16> to vector<1x1x8x8xbf16>
    tpu.vector_store %arg6[%c0_33, %c3, %c0_34, %c0_35], %47 {strides = array<i32>} : memref<1x4x8x8xbf16, #tpu.memory_space<vmem>>, vector<1x1x8x8xbf16>,
    %48 = vector.extract_strided_slice %12 {offsets = [0, 24], sizes = [8, 8], strides = [1, 1]} : vector<8x32xf32> to vector<8x8xf32>
    %49 = arith.truncf %48 : vector<8x8xf32> to vector<8x8xbf16>
    %c0_36 = arith.constant 0 : index
    %c3_37 = arith.constant 3 : index
    %c0_38 = arith.constant 0 : index
    %c0_39 = arith.constant 0 : index
    %50 = vector.load %arg7[%c0_36, %c3_37, %c0_38, %c0_39] : memref<1x4x8x8xbf16, #tpu.memory_space<vmem>>, vector<1x1x8x8xbf16>
    %51 = vector.shape_cast %50 : vector<1x1x8x8xbf16> to vector<8x8xbf16>
    %52 = vector.shape_cast %49 : vector<8x8xbf16> to vector<1x1x8x8xbf16>
    tpu.vector_store %arg7[%c0_36, %c3_37, %c0_38, %c0_39], %52 {strides = array<i32>} : memref<1x4x8x8xbf16, #tpu.memory_space<vmem>>, vector<1x1x8x8xbf16>,
    return
  }
  func.func @transform_0(%arg0: i32) -> (i32, i32, i32) {
    %c0_i32 = arith.constant 0 : i32
    %c0_i32_0 = arith.constant 0 : i32
    %c0_i32_1 = arith.constant 0 : i32
    return %arg0, %c0_i32, %c0_i32_0 : i32, i32, i32
  }
  func.func @transform_1(%arg0: i32) -> (i32, i32) {
    %c0_i32 = arith.constant 0 : i32
    %c0_i32_0 = arith.constant 0 : i32
    %c0_i32_1 = arith.constant 0 : i32
    return %c0_i32, %c0_i32_0 : i32, i32
  }
  func.func @transform_2(%arg0: i32) -> (i32, i32) {
    %c0_i32 = arith.constant 0 : i32
    %c0_i32_0 = arith.constant 0 : i32
    %c0_i32_1 = arith.constant 0 : i32
    return %c0_i32, %c0_i32_0 : i32, i32
  }
  func.func @transform_3(%arg0: i32) -> (i32, i32) {
    %c0_i32 = arith.constant 0 : i32
    %c0_i32_0 = arith.constant 0 : i32
    %c0_i32_1 = arith.constant 0 : i32
    return %c0_i32, %c0_i32_0 : i32, i32
  }
  func.func @transform_4(%arg0: i32) -> (i32, i32) {
    %c0_i32 = arith.constant 0 : i32
    %c0_i32_0 = arith.constant 0 : i32
    %c0_i32_1 = arith.constant 0 : i32
    return %c0_i32, %c0_i32_0 : i32, i32
  }
  func.func @transform_5(%arg0: i32) -> (i32, i32, i32, i32) {
    %c0_i32 = arith.constant 0 : i32
    %c0_i32_0 = arith.constant 0 : i32
    %c0_i32_1 = arith.constant 0 : i32
    %c0_i32_2 = arith.constant 0 : i32
    return %arg0, %c0_i32, %c0_i32_0, %c0_i32_1 : i32, i32, i32, i32
  }
  func.func @transform_6(%arg0: i32) -> (i32, i32, i32, i32) {
    %c0_i32 = arith.constant 0 : i32
    %c0_i32_0 = arith.constant 0 : i32
    %c0_i32_1 = arith.constant 0 : i32
    %c0_i32_2 = arith.constant 0 : i32
    return %arg0, %c0_i32, %c0_i32_0, %c0_i32_1 : i32, i32, i32, i32
  }
}

</mosaic_0001>

<llo_original>
// kernel: tpu_custom_call.1
$region0: #{tpu_custom_call.1}
  #allocation0 [shape = 'u32[]', space=smem, size = 0x4, offset = 0x4, fixed_abs, tag = 'smem constant byte address 0x4 - core index']
  #allocation1 [shape = 'u32[144,128]{1,0:T(1,128)}', space=vmem, size = 0x12000, scoped, tag = 'internal scratch']
  %s0 = inlined_call_operand.hbm [shape: f32[2,8,32], index: 0, kind: input, shape index: {}]
  %s1 = inlined_call_operand.hbm [shape: bf16[32,32], index: 1, kind: input, shape index: {}]
  %s2 = inlined_call_operand.vmem [shape: f32[1,32], index: 2, kind: input, shape index: {}]
  %s3 = inlined_call_operand.hbm [shape: bf16[32,32], index: 3, kind: input, shape index: {}]
  %s4 = inlined_call_operand.vmem [shape: f32[1,32], index: 4, kind: input, shape index: {}]
  %s5 = inlined_call_operand.hbm [shape: bf16[2,4,8,8], index: 5, kind: output, shape index: {0}]
  %s6 = inlined_call_operand.hbm [shape: bf16[2,4,8,8], index: 6, kind: output, shape index: {1}]
  %7 = xla_tuple %s5, %s6
  %s8 = sld [smem:[#allocation0]]
  $region73: #{tpu_custom_call.1} parent=0
    _
  %s10 = ssub.s32 1, %s8
  %s11 = scalar_select 0, %s10, %s8
  $region1: #{tpu_custom_call.1} parent=0
    #allocation2 [shape = 'u8[8192]{0}', space=vmem, size = 0x2000, scoped, tag = 'input window, operand 0']
    #allocation3 [shape = 's32[2]{0}', space=sflag, size = 0x8, scoped, tag = 'scoped memory for tpu_custom_call.1']
    #allocation4 [shape = 's32[2]{0}', space=sflag, size = 0x8, scoped, tag = 'scoped memory for tpu_custom_call.1']
    #allocation5 [shape = 'u8[8192]{0}', space=vmem, size = 0x2000, scoped, tag = 'input window, operand 1, single buffered']
    #allocation6 [shape = 's32[1]{0}', space=sflag, size = 0x4, scoped, tag = 'scoped memory for tpu_custom_call.1']
    #allocation7 [shape = 'u8[8192]{0}', space=vmem, size = 0x2000, scoped, tag = 'input window, operand 3, single buffered']
    #allocation8 [shape = 'u8[16384]{0}', space=vmem, size = 0x4000, scoped, tag = 'output window, operand 0']
    #allocation9 [shape = 'u8[16384]{0}', space=vmem, size = 0x4000, scoped, tag = 'output window, operand 1']
    #allocation10 [shape = 's32[2]{0}', space=sflag, size = 0x8, scoped, tag = 'scoped memory for tpu_custom_call.1']
    %12 = vsyncpa [#allocation3], 0
    %s13 = scalar_lea.sflag [#allocation3], 1
    %14 = vsyncpa %s13, 0
    %15 = vsyncpa [#allocation6], 0
    %16 = vsyncpa [#allocation4], 0
    %s17 = scalar_lea.sflag [#allocation4], 1
    %18 = vsyncpa %s17, 0
    %19 = vsyncpa [#allocation10], 0
    %s20 = scalar_lea.sflag [#allocation10], 1
    %21 = vsyncpa %s20, 0
    loop: start=0, step=1, limit=4
    $region2: #{tpu_custom_call.1} parent=1 // loop_pre_header
      _
    $region3: #{tpu_custom_call.1} parent=1 // loop_header
      %s23 = sphi 0, %s27
      %p24 = scmp.ge.s32.totalorder %s23, 4
      %s33 = sphi 0, %s35
      %s36 = sphi 0, %s33
      %s37 = sphi 0, %s36
      %s53 = sphi 0, %s37
      %s57 = sphi 0, %s57
      %s59 = sphi 0, %s57
      %s60 = sphi 0, %s59
      %s74 = sphi 0, %s60
      %s78 = sphi 0, %s78
      %s80 = sphi 0, %s78
      %s81 = sphi 0, %s80
      %s95 = sphi 0, %s81
      %s99 = sphi 0, %s99
      %s101 = sphi 0, %s99
      %s102 = sphi 0, %s101
      %s116 = sphi 0, %s102
      %s120 = sphi 0, %s120
      %s122 = sphi 0, %s120
      %s123 = sphi 0, %s122
      %s137 = sphi 0, %s123
      %s143 = sphi 0, %s145
      %s146 = sphi 0, %s143
      %s147 = sphi 0, %s146
      %s163 = sphi 0, %s147
      %s169 = sphi 0, %s171
      %s172 = sphi 0, %s169
      %s173 = sphi 0, %s172
      %s189 = sphi 0, %s173
    $region4: #{tpu_custom_call.1} parent=1 // loop_header_branch
      %26 = sbr.rel (%p24) target = $region8
    $region5: #{tpu_custom_call.1} parent=1 // loop_body
      %s28 = ssub.s32 %s23, 1
      %s29 = ssub.s32 %s23, 2
      %s30 = sadd.s32 %s23, 1
      %s31 = ssub.s32 %s23, %s30
      %p32 = scmp.eq.s32.totalorder %s31, 0
      %s34 = sadd.s32 %s33, 1
      %s35 = scalar_select %p32, %s33, %s34
      %p38 = pneg %p32
      %p39 = scmp.eq.s32.totalorder %s23, 1
      %p40 = por %p38, %p39
      %p41 = scmp.ne.s32.totalorder %s33, %s36
      %p42 = scmp.eq.s32.totalorder %s23, 0
      %p43 = por %p41, %p42
      %p44 = scmp.ne.s32.totalorder %s33, %s36
      %p45 = scmp.eq.s32.totalorder %s28, 1
      %p46 = por %p44, %p45
      %p47 = scmp.ne.s32.totalorder %s36, %s37
      %p48 = scmp.eq.s32.totalorder %s28, 0
      %p49 = por %p47, %p48
      %p50 = scmp.ne.s32.totalorder %s36, %s37
      %p51 = scmp.eq.s32.totalorder %s29, 1
      %p52 = por %p50, %p51
      %p54 = scmp.ne.s32.totalorder %s37, %s53
      %p55 = scmp.eq.s32.totalorder %s29, 0
      %p56 = por %p54, %p55
      %s58 = sadd.s32 %s57, 1
      %p61 = scmp.eq.s32.totalorder %s23, 1
      %p62 = scmp.ne.s32.totalorder %s57, %s59
      %p63 = scmp.eq.s32.totalorder %s23, 0
      %p64 = por %p62, %p63
      %p65 = scmp.ne.s32.totalorder %s57, %s59
      %p66 = scmp.eq.s32.totalorder %s28, 1
      %p67 = por %p65, %p66
      %p68 = scmp.ne.s32.totalorder %s59, %s60
      %p69 = scmp.eq.s32.totalorder %s28, 0
      %p70 = por %p68, %p69
      %p71 = scmp.ne.s32.totalorder %s59, %s60
      %p72 = scmp.eq.s32.totalorder %s29, 1
      %p73 = por %p71, %p72
      %p75 = scmp.ne.s32.totalorder %s60, %s74
      %p76 = scmp.eq.s32.totalorder %s29, 0
      %p77 = por %p75, %p76
      %s79 = sadd.s32 %s78, 1
      %p82 = scmp.eq.s32.totalorder %s23, 1
      %p83 = scmp.ne.s32.totalorder %s78, %s80
      %p84 = scmp.eq.s32.totalorder %s23, 0
      %p85 = por %p83, %p84
      %p86 = scmp.ne.s32.totalorder %s78, %s80
      %p87 = scmp.eq.s32.totalorder %s28, 1
      %p88 = por %p86, %p87
      %p89 = scmp.ne.s32.totalorder %s80, %s81
      %p90 = scmp.eq.s32.totalorder %s28, 0
      %p91 = por %p89, %p90
      %p92 = scmp.ne.s32.totalorder %s80, %s81
      %p93 = scmp.eq.s32.totalorder %s29, 1
      %p94 = por %p92, %p93
      %p96 = scmp.ne.s32.totalorder %s81, %s95
      %p97 = scmp.eq.s32.totalorder %s29, 0
      %p98 = por %p96, %p97
      %s100 = sadd.s32 %s99, 1
      %p103 = scmp.eq.s32.totalorder %s23, 1
      %p104 = scmp.ne.s32.totalorder %s99, %s101
      %p105 = scmp.eq.s32.totalorder %s23, 0
      %p106 = por %p104, %p105
      %p107 = scmp.ne.s32.totalorder %s99, %s101
      %p108 = scmp.eq.s32.totalorder %s28, 1
      %p109 = por %p107, %p108
      %p110 = scmp.ne.s32.totalorder %s101, %s102
      %p111 = scmp.eq.s32.totalorder %s28, 0
      %p112 = por %p110, %p111
      %p113 = scmp.ne.s32.totalorder %s101, %s102
      %p114 = scmp.eq.s32.totalorder %s29, 1
      %p115 = por %p113, %p114
      %p117 = scmp.ne.s32.totalorder %s102, %s116
      %p118 = scmp.eq.s32.totalorder %s29, 0
      %p119 = por %p117, %p118
      %s121 = sadd.s32 %s120, 1
      %p124 = scmp.eq.s32.totalorder %s23, 1
      %p125 = scmp.ne.s32.totalorder %s120, %s122
      %p126 = scmp.eq.s32.totalorder %s23, 0
      %p127 = por %p125, %p126
      %p128 = scmp.ne.s32.totalorder %s120, %s122
      %p129 = scmp.eq.s32.totalorder %s28, 1
      %p130 = por %p128, %p129
      %p131 = scmp.ne.s32.totalorder %s122, %s123
      %p132 = scmp.eq.s32.totalorder %s28, 0
      %p133 = por %p131, %p132
      %p134 = scmp.ne.s32.totalorder %s122, %s123
      %p135 = scmp.eq.s32.totalorder %s29, 1
      %p136 = por %p134, %p135
      %p138 = scmp.ne.s32.totalorder %s123, %s137
      %p139 = scmp.eq.s32.totalorder %s29, 0
      %p140 = por %p138, %p139
      %s141 = ssub.s32 %s23, %s30
      %p142 = scmp.eq.s32.totalorder %s141, 0
      %s144 = sadd.s32 %s143, 1
      %s145 = scalar_select %p142, %s143, %s144
      %p148 = pneg %p142
      %p149 = scmp.eq.s32.totalorder %s23, 1
      %p150 = por %p148, %p149
      %p151 = scmp.ne.s32.totalorder %s143, %s146
      %p152 = scmp.eq.s32.totalorder %s23, 0
      %p153 = por %p151, %p152
      %p154 = scmp.ne.s32.totalorder %s143, %s146
      %p155 = scmp.eq.s32.totalorder %s28, 1
      %p156 = por %p154, %p155
      %p157 = scmp.ne.s32.totalorder %s146, %s147
      %p158 = scmp.eq.s32.totalorder %s28, 0
      %p159 = por %p157, %p158
      %p160 = scmp.ne.s32.totalorder %s146, %s147
      %p161 = scmp.eq.s32.totalorder %s29, 1
      %p162 = por %p160, %p161
      %p164 = scmp.ne.s32.totalorder %s147, %s163
      %p165 = scmp.eq.s32.totalorder %s29, 0
      %p166 = por %p164, %p165
      %s167 = ssub.s32 %s23, %s30
      %p168 = scmp.eq.s32.totalorder %s167, 0
      %s170 = sadd.s32 %s169, 1
      %s171 = scalar_select %p168, %s169, %s170
      %p174 = pneg %p168
      %p175 = scmp.eq.s32.totalorder %s23, 1
      %p176 = por %p174, %p175
      %p177 = scmp.ne.s32.totalorder %s169, %s172
      %p178 = scmp.eq.s32.totalorder %s23, 0
      %p179 = por %p177, %p178
      %p180 = scmp.ne.s32.totalorder %s169, %s172
      %p181 = scmp.eq.s32.totalorder %s28, 1
      %p182 = por %p180, %p181
      %p183 = scmp.ne.s32.totalorder %s172, %s173
      %p184 = scmp.eq.s32.totalorder %s28, 0
      %p185 = por %p183, %p184
      %p186 = scmp.ne.s32.totalorder %s172, %s173
      %p187 = scmp.eq.s32.totalorder %s29, 1
      %p188 = por %p186, %p187
      %p190 = scmp.ne.s32.totalorder %s173, %s189
      %p191 = scmp.eq.s32.totalorder %s29, 0
      %p192 = por %p190, %p191
      %p193 = scmp.le.s32.totalorder 1, %s23
      %p194 = scmp.lt.s32.totalorder %s23, 3
      %p195 = pnand %p193, %p194
      %p196 = pneg %p195
      // Predicated region
      $region9: #{tpu_custom_call.1} parent=5 // pred_check
        _
      $region10: #{tpu_custom_call.1} parent=5 // pred_check_branch
        %198 = sbr.rel (%p195) target = $region12
      $region11: #{tpu_custom_call.1} parent=5 // pred_region
        %s199 = ssub.s32 %s23, 1
        // Predicated region
        $region13: #{tpu_custom_call.1} parent=11 // pred_check
          %p200 = pneg %p70
        $region14: #{tpu_custom_call.1} parent=11 // pred_check_branch
          %202 = sbr.rel (%p200) target = $region16
        $region15: #{tpu_custom_call.1} parent=11 // pred_region
          %s204 = ssub.s32 256, 256
          %205 = vsyncadd [#allocation6], %s204
          %s206 = sshll.u32 [#allocation5], 4
          %s207 = int_to_ptr.vmem [resolvable:$true] %s206
          %212 = dma.hbm_to_vmem [thread:$0]  %s1, 256, %s207, [#allocation6], 64, 64, 4
        $region16: #{tpu_custom_call.1} parent=11 // pred_fallthru
          _
        // Predicated region
        $region17: #{tpu_custom_call.1} parent=11 // pred_check
          %p213 = pneg %p91
        $region18: #{tpu_custom_call.1} parent=11 // pred_check_branch
          %215 = sbr.rel (%p213) target = $region20
        $region19: #{tpu_custom_call.1} parent=11 // pred_region
          _
        $region20: #{tpu_custom_call.1} parent=11 // pred_fallthru
          _
        // Predicated region
        $region21: #{tpu_custom_call.1} parent=11 // pred_check
          %p216 = pneg %p112
        $region22: #{tpu_custom_call.1} parent=11 // pred_check_branch
          %218 = sbr.rel (%p216) target = $region24
        $region23: #{tpu_custom_call.1} parent=11 // pred_region
          %s220 = ssub.s32 256, 256
          %221 = vsyncadd [#allocation6], %s220
          %s222 = sshll.u32 [#allocation7], 4
          %s223 = int_to_ptr.vmem [resolvable:$true] %s222
          %228 = dma.hbm_to_vmem [thread:$0]  %s3, 256, %s223, [#allocation6], 64, 64, 4
        $region24: #{tpu_custom_call.1} parent=11 // pred_fallthru
          _
        // Predicated region
        $region25: #{tpu_custom_call.1} parent=11 // pred_check
          %p229 = pneg %p133
        $region26: #{tpu_custom_call.1} parent=11 // pred_check_branch
          %231 = sbr.rel (%p229) target = $region28
        $region27: #{tpu_custom_call.1} parent=11 // pred_region
          _
        $region28: #{tpu_custom_call.1} parent=11 // pred_fallthru
          _
      $region12: #{tpu_custom_call.1} parent=5 // pred_fallthru
        _
      %p232 = scmp.lt.s32.totalorder %s23, 2
      // Predicated region
      $region29: #{tpu_custom_call.1} parent=5 // pred_check
        %p233 = pneg %p232
      $region30: #{tpu_custom_call.1} parent=5 // pred_check_branch
        %235 = sbr.rel (%p233) target = $region32
      $region31: #{tpu_custom_call.1} parent=5 // pred_region
        // Predicated region
        $region33: #{tpu_custom_call.1} parent=31 // pred_check
          %p236 = pneg %p43
        $region34: #{tpu_custom_call.1} parent=31 // pred_check_branch
          %238 = sbr.rel (%p236) target = $region36
        $region35: #{tpu_custom_call.1} parent=31 // pred_region
          %s239 = sand.u32 %s33, 1
          %s240 = scalar_lea.sflag [#allocation3], %s239
          %s241 = sand.u32 %s33, 1
          %s242 = smul.addr %s241, 8
          %s243 = scalar_lea.vmem [#allocation2], %s242
          %s245 = ssub.s32 128, 128
          %246 = vsyncadd %s240, %s245
          %s247 = smul.addr %s23, 128
          %s248 = scalar_lea.hbm %s0, %s247
          %s250 = sshll.u32 %s243, 4
          %s251 = int_to_ptr.vmem [resolvable:$true] %s250
          %253 = dma.hbm_to_vmem [thread:$0]  %s248, 128, %s251, %s240
        $region36: #{tpu_custom_call.1} parent=31 // pred_fallthru
          _
      $region32: #{tpu_custom_call.1} parent=5 // pred_fallthru
        _
      %p254 = scmp.le.s32.totalorder 1, %s23
      %p255 = scmp.lt.s32.totalorder %s23, 3
      %p256 = pnand %p254, %p255
      %p257 = pneg %p256
      // Predicated region
      $region37: #{tpu_custom_call.1} parent=5 // pred_check
        _
      $region38: #{tpu_custom_call.1} parent=5 // pred_check_branch
        %259 = sbr.rel (%p256) target = $region40
      $region39: #{tpu_custom_call.1} parent=5 // pred_region
        %s260 = ssub.s32 %s23, 1
        %s261 = sand.u32 %s36, 1
        %s262 = scalar_lea.sflag [#allocation3], %s261
        %s263 = sand.u32 %s36, 1
        %s264 = smul.addr %s263, 8
        %s265 = scalar_lea.vmem [#allocation2], %s264
        // Predicated region
        $region41: #{tpu_custom_call.1} parent=39 // pred_check
          %p266 = pneg %p49
        $region42: #{tpu_custom_call.1} parent=39 // pred_check_branch
          %268 = sbr.rel (%p266) target = $region44
        $region43: #{tpu_custom_call.1} parent=39 // pred_region
          %269 = dma.done %s262, 128
        $region44: #{tpu_custom_call.1} parent=39 // pred_fallthru
          _
        // Predicated region
        $region45: #{tpu_custom_call.1} parent=39 // pred_check
          %p270 = pneg %p70
        $region46: #{tpu_custom_call.1} parent=39 // pred_check_branch
          %272 = sbr.rel (%p270) target = $region48
        $region47: #{tpu_custom_call.1} parent=39 // pred_region
          %273 = dma.done [#allocation6], 256
        $region48: #{tpu_custom_call.1} parent=39 // pred_fallthru
          _
        // Predicated region
        $region49: #{tpu_custom_call.1} parent=39 // pred_check
          %p274 = pneg %p112
        $region50: #{tpu_custom_call.1} parent=39 // pred_check_branch
          %276 = sbr.rel (%p274) target = $region52
        $region51: #{tpu_custom_call.1} parent=39 // pred_region
          %277 = dma.done [#allocation6], 256
        $region52: #{tpu_custom_call.1} parent=39 // pred_fallthru
          _
        %s278 = sand.u32 %s36, 1
        %s279 = scalar_lea.sflag [#allocation3], %s278
        %s280 = sand.u32 %s36, 1
        %s281 = smul.addr %s280, 8
        %s282 = scalar_lea.vmem [#allocation2], %s281
        %p283 = pneg %p49
        %p284 = pneg %p46
        %p285 = pneg %p70
        %p286 = pneg %p67
        %p287 = pneg %p91
        %p288 = pneg %p88
        %p289 = pneg %p112
        %p290 = pneg %p109
        %p291 = pneg %p133
        %p292 = pneg %p130
        %p293 = pneg %p159
        %p294 = pneg %p156
        %s295 = sand.u32 %s146, 1
        %s296 = scalar_lea.sflag [#allocation4], %s295
        %s297 = sand.u32 %s146, 1
        %s298 = smul.addr %s297, 16
        %s299 = scalar_lea.vmem [#allocation8], %s298
        %p300 = pneg %p185
        %p301 = pneg %p182
        %s302 = sand.u32 %s172, 1
        %s303 = scalar_lea.sflag [#allocation10], %s302
        %s304 = sand.u32 %s172, 1
        %s305 = smul.addr %s304, 16
        %s306 = scalar_lea.vmem [#allocation9], %s305
        %v308 = vld [vmem:[%s265] sm:$0xff]
        %v309 = vpack.c.bf16 %v308, %v308
        %v310 = vld [vmem:[#allocation5] sm:$0xf]
        %v311 = vld [vmem:[#allocation5 + $0x4] sm:$0xf]
        %v312 = vld [vmem:[#allocation5 + $0x8] sm:$0xf]
        %v313 = vld [vmem:[#allocation5 + $0xc] sm:$0xf]
        %v314 = vld [vmem:[%s2] sm:$0x1]
        %v316 = vlaneseq
        %v317 = vshrl.u32 %v316, 7
        %v318 = vsub.s32 0, %v317
        %v319 = vrot.slane %v314, %v318
        %v325 = vunpack.c.l.b16 %v310
        %v326 = vunpack.c.l.b16 %v311
        %v327 = vunpack.c.l.b16 %v312
        %v328 = vunpack.c.l.b16 %v313
        %v329 = vpack.c.b16 %v326, %v325
        %v330 = vpack.c.b16 %v328, %v327
        %vm333 = vcmask 261120
        %v335 = vsel %vm333, %v309, 0
        %337 = vmatprep.subr.bf16.mxu0 0
        %338 = vmatpush1.bf16.msra.mxu0 0
        %339 = vmatprep.subr.bf16.mxu0 0
        %340 = vmatpush1.bf16.msra.mxu0 0
        %341 = vmatprep.subr.bf16.mxu0 0
        %342 = vmatpush1.bf16.msra.mxu0 0
        %343 = vmatprep.subr.bf16.mxu0 0
        %344 = vmatpush1.bf16.msra.mxu0 0
        %345 = vmatprep.subr.bf16.mxu0 0
        %346 = vmatpush1.bf16.msra.mxu0 0
        %347 = vmatprep.subr.bf16.mxu0 0
        %348 = vmatpush1.bf16.msra.mxu0 0
        %349 = vmatprep.subr.bf16.mxu0 0
        %350 = vmatpush1.bf16.msra.mxu0 %v330
        %351 = vmatprep.subr.bf16.mxu0 0
        %352 = vmatpush1.bf16.msra.mxu0 %v329
        %353 = vmatprep.subr.bf16.mxu0 0
        %354 = vmatpush2.bf16.msra.mxu0 0
        %355 = vmatprep.subr.bf16.mxu0 0
        %356 = vmatpush2.bf16.msra.mxu0 0
        %357 = vmatprep.subr.bf16.mxu0 0
        %358 = vmatpush2.bf16.msra.mxu0 0
        %359 = vmatprep.subr.bf16.mxu0 0
        %360 = vmatpush2.bf16.msra.mxu0 0
        %361 = vmatprep.subr.bf16.mxu0 0
        %362 = vmatpush2.bf16.msra.mxu0 0
        %363 = vmatprep.subr.bf16.mxu0 0
        %364 = vmatpush2.bf16.msra.mxu0 0
        %365 = vmatprep.subr.bf16.mxu0 0
        %366 = vmatpush2.bf16.msra.mxu0 0
        %367 = vmatprep.subr.bf16.mxu0 0
        %368 = vmatpush2.bf16.msra.mxu0 0
        %369 = vmatprep.mubr.bf16.mxu0 0
        %370 = vmatmul.mubr.bf16.gmra.mxu0 %v335
        %v371 = vpop.f32.mrf.mxu0
        %v372 = vadd.f32 %v319, %v371
        %v373 = vpop.f32.mrf.mxu0
        %v374 = vpop.f32.mrf.mxu0
        %v375 = vpop.f32.mrf.mxu0
        %376 = vdwg.mxu0
        %v377 = vld [vmem:[#allocation7] sm:$0xf]
        %v378 = vld [vmem:[#allocation7 + $0x4] sm:$0xf]
        %v379 = vld [vmem:[#allocation7 + $0x8] sm:$0xf]
        %v380 = vld [vmem:[#allocation7 + $0xc] sm:$0xf]
        %v381 = vld [vmem:[%s4] sm:$0x1]
        %v383 = vlaneseq
        %v384 = vshrl.u32 %v383, 7
        %v385 = vsub.s32 0, %v384
        %v386 = vrot.slane %v381, %v385
        %v392 = vunpack.c.l.b16 %v377
        %v393 = vunpack.c.l.b16 %v378
        %v394 = vunpack.c.l.b16 %v379
        %v395 = vunpack.c.l.b16 %v380
        %v396 = vpack.c.b16 %v393, %v392
        %v397 = vpack.c.b16 %v395, %v394
        %400 = vmatprep.subr.bf16.mxu0 0
        %401 = vmatpush1.bf16.msra.mxu0 0
        %402 = vmatprep.subr.bf16.mxu0 0
        %403 = vmatpush1.bf16.msra.mxu0 0
        %404 = vmatprep.subr.bf16.mxu0 0
        %405 = vmatpush1.bf16.msra.mxu0 0
        %406 = vmatprep.subr.bf16.mxu0 0
        %407 = vmatpush1.bf16.msra.mxu0 0
        %408 = vmatprep.subr.bf16.mxu0 0
        %409 = vmatpush1.bf16.msra.mxu0 0
        %410 = vmatprep.subr.bf16.mxu0 0
        %411 = vmatpush1.bf16.msra.mxu0 0
        %412 = vmatprep.subr.bf16.mxu0 0
        %413 = vmatpush1.bf16.msra.mxu0 %v397
        %414 = vmatprep.subr.bf16.mxu0 0
        %415 = vmatpush1.bf16.msra.mxu0 %v396
        %416 = vmatprep.subr.bf16.mxu0 0
        %417 = vmatpush2.bf16.msra.mxu0 0
        %418 = vmatprep.subr.bf16.mxu0 0
        %419 = vmatpush2.bf16.msra.mxu0 0
        %420 = vmatprep.subr.bf16.mxu0 0
        %421 = vmatpush2.bf16.msra.mxu0 0
        %422 = vmatprep.subr.bf16.mxu0 0
        %423 = vmatpush2.bf16.msra.mxu0 0
        %424 = vmatprep.subr.bf16.mxu0 0
        %425 = vmatpush2.bf16.msra.mxu0 0
        %426 = vmatprep.subr.bf16.mxu0 0
        %427 = vmatpush2.bf16.msra.mxu0 0
        %428 = vmatprep.subr.bf16.mxu0 0
        %429 = vmatpush2.bf16.msra.mxu0 0
        %430 = vmatprep.subr.bf16.mxu0 0
        %431 = vmatpush2.bf16.msra.mxu0 0
        %432 = vmatprep.mubr.bf16.mxu0 0
        %433 = vmatmul.mubr.bf16.gmra.mxu0 %v335
        %v434 = vpop.f32.mrf.mxu0
        %v435 = vadd.f32 %v386, %v434
        %v436 = vpop.f32.mrf.mxu0
        %v437 = vpop.f32.mrf.mxu0
        %v438 = vpop.f32.mrf.mxu0
        %439 = vdwg.mxu0
        %v440 = vpack.c.bf16 %v372, %v372
        %vm441 = vcmask 60416
        %442 = vst.msk [vmem:[%s299] sm:$0xf] %vm441, %v440
        %v443 = vpack.c.bf16 %v435, %v435
        %444 = vst.msk [vmem:[%s306] sm:$0xf] %vm441, %v443
        %v446 = vunpack.c.l.b16 %v440
        %v447 = vpack.c.b16 %v446, %v446
        %448 = vrot.lane.b32.xlu0 %v447, 120
        %v449 = vpop.permute.xlu0 %448
        %s451 = scalar_lea.vmem %s299, 4 [#allocation8]
        %452 = vst.msk [vmem:[%s451] sm:$0xf] %vm441, %v449
        %v454 = vunpack.c.l.b16 %v443
        %v455 = vpack.c.b16 %v454, %v454
        %456 = vrot.lane.b32.xlu0 %v455, 120
        %v457 = vpop.permute.xlu0 %456
        %s459 = scalar_lea.vmem %s306, 4 [#allocation9]
        %460 = vst.msk [vmem:[%s459] sm:$0xf] %vm441, %v457
        %461 = vrot.lane.b32.xlu0 %v447, 112
        %v462 = vpop.permute.xlu0 %461
        %s464 = scalar_lea.vmem %s299, 8 [#allocation8]
        %465 = vst.msk [vmem:[%s464] sm:$0xf] %vm441, %v462
        %466 = vrot.lane.b32.xlu0 %v455, 112
        %v467 = vpop.permute.xlu0 %466
        %s469 = scalar_lea.vmem %s306, 8 [#allocation9]
        %470 = vst.msk [vmem:[%s469] sm:$0xf] %vm441, %v467
        %471 = vrot.lane.b32.xlu0 %v447, 104
        %v472 = vpop.permute.xlu0 %471
        %s474 = scalar_lea.vmem %s299, 12 [#allocation8]
        %475 = vst.msk [vmem:[%s474] sm:$0xf] %vm441, %v472
        %476 = vrot.lane.b32.xlu0 %v455, 104
        %v477 = vpop.permute.xlu0 %476
        %s479 = scalar_lea.vmem %s306, 12 [#allocation9]
        %480 = vst.msk [vmem:[%s479] sm:$0xf] %vm441, %v477
        %s481 = sand.u32 %s146, 1
        %s482 = scalar_lea.sflag [#allocation4], %s481
        %s483 = sand.u32 %s146, 1
        %s484 = smul.addr %s483, 16
        %s485 = scalar_lea.vmem [#allocation8], %s484
        %s486 = sand.u32 %s172, 1
        %s487 = scalar_lea.sflag [#allocation10], %s486
        %s488 = sand.u32 %s172, 1
        %s489 = smul.addr %s488, 16
        %s490 = scalar_lea.vmem [#allocation9], %s489
        // Predicated region
        $region53: #{tpu_custom_call.1} parent=39 // pred_check
          %p491 = pneg %p156
        $region54: #{tpu_custom_call.1} parent=39 // pred_check_branch
          %493 = sbr.rel (%p491) target = $region56
        $region55: #{tpu_custom_call.1} parent=39 // pred_region
          %s495 = ssub.s32 256, 256
          %496 = vsyncadd %s482, %s495
          %s497 = smul.addr %s28, 4
          %s498 = smul.addr %s497, 64
          %s499 = scalar_lea.hbm %s5, %s498
          %s500 = sshll.u32 %s485, 4
          %s501 = int_to_ptr.vmem [resolvable:$true] %s500
          %506 = dma.vmem_to_hbm [thread:$0]  %s501, 256, %s499, %s482, 64, 64, 4
        $region56: #{tpu_custom_call.1} parent=39 // pred_fallthru
          _
        // Predicated region
        $region57: #{tpu_custom_call.1} parent=39 // pred_check
          %p507 = pneg %p182
        $region58: #{tpu_custom_call.1} parent=39 // pred_check_branch
          %509 = sbr.rel (%p507) target = $region60
        $region59: #{tpu_custom_call.1} parent=39 // pred_region
          %s511 = ssub.s32 256, 256
          %512 = vsyncadd %s487, %s511
          %s513 = smul.addr %s28, 4
          %s514 = smul.addr %s513, 64
          %s515 = scalar_lea.hbm %s6, %s514
          %s516 = sshll.u32 %s490, 4
          %s517 = int_to_ptr.vmem [resolvable:$true] %s516
          %522 = dma.vmem_to_hbm [thread:$0]  %s517, 256, %s515, %s487, 64, 64, 4
        $region60: #{tpu_custom_call.1} parent=39 // pred_fallthru
          _
      $region40: #{tpu_custom_call.1} parent=5 // pred_fallthru
        _
      %p523 = scmp.le.s32.totalorder 2, %s23
      // Predicated region
      $region61: #{tpu_custom_call.1} parent=5 // pred_check
        %p524 = pneg %p523
      $region62: #{tpu_custom_call.1} parent=5 // pred_check_branch
        %526 = sbr.rel (%p524) target = $region64
      $region63: #{tpu_custom_call.1} parent=5 // pred_region
        %s527 = ssub.s32 %s23, 2
        // Predicated region
        $region65: #{tpu_custom_call.1} parent=63 // pred_check
          %p528 = pneg %p162
        $region66: #{tpu_custom_call.1} parent=63 // pred_check_branch
          %530 = sbr.rel (%p528) target = $region68
        $region67: #{tpu_custom_call.1} parent=63 // pred_region
          %s531 = sand.u32 %s147, 1
          %s532 = scalar_lea.sflag [#allocation4], %s531
          %s533 = sand.u32 %s147, 1
          %s534 = smul.addr %s533, 16
          %s535 = scalar_lea.vmem [#allocation8], %s534
          %536 = dma.done %s532, 256
        $region68: #{tpu_custom_call.1} parent=63 // pred_fallthru
          _
        // Predicated region
        $region69: #{tpu_custom_call.1} parent=63 // pred_check
          %p537 = pneg %p188
        $region70: #{tpu_custom_call.1} parent=63 // pred_check_branch
          %539 = sbr.rel (%p537) target = $region72
        $region71: #{tpu_custom_call.1} parent=63 // pred_region
          %s540 = sand.u32 %s173, 1
          %s541 = scalar_lea.sflag [#allocation10], %s540
          %s542 = sand.u32 %s173, 1
          %s543 = smul.addr %s542, 16
          %s544 = scalar_lea.vmem [#allocation9], %s543
          %545 = dma.done %s541, 256
        $region72: #{tpu_custom_call.1} parent=63 // pred_fallthru
          _
      $region64: #{tpu_custom_call.1} parent=5 // pred_fallthru
        _
    $region6: #{tpu_custom_call.1} parent=1 // loop_footer
      %s27 = sadd.s32 1, %s23
    $region7: #{tpu_custom_call.1} parent=1 // loop_footer_branch
      %22 = sbr.rel target = $region3
    $region8: #{tpu_custom_call.1} parent=1 // loop_exit
      _
    %546 = vsyncpa [#allocation3], 1
    %s547 = scalar_lea.sflag [#allocation3], 1
    %548 = vsyncpa %s547, 1
    %549 = vsyncpa [#allocation6], 1
    %550 = vsyncpa [#allocation4], 1
    %s551 = scalar_lea.sflag [#allocation4], 1
    %552 = vsyncpa %s551, 1
    %553 = vsyncpa [#allocation10], 1
    %s554 = scalar_lea.sflag [#allocation10], 1
    %555 = vsyncpa %s554, 1

</llo_original>
